<compile_context>
chip_gen: v7x
topology: tpu7x:2x2x1
jax: 0.10.0
libtpu: 0.0.40
codegen_flags: <defaults>
</compile_context>

<pallas_src>
import functools
import math

import jax
import jax.numpy as jnp
from jax.experimental import pallas as pl
from jax.experimental.pallas import tpu as pltpu


def _mha_kernel(de_lens_ref,                      # scalar prefetch (SMEM, (B,) int32)
                embs_ref, wqkv_ref, bqkv_ref, w0_ref, b0_ref,
                out_ref, *, num_heads, d_k, seq_len, d_emb, batch_block):
    """grid = (B // Bblk,). One step = full MHA for Bblk sentences."""
    hd = num_heads * d_k
    rows = batch_block * seq_len
    base = pl.program_id(0) * batch_block

    # ---- fused QKV projection for ALL heads / ALL sentences in the block ----
    # bf16 operands, f32 accumulation; M = Bblk*S rows feed the MXU at once.
    x2d = embs_ref[...].reshape(rows, d_emb)                           # bf16 (Bblk*S, d_emb)
    qkv = jnp.dot(x2d, wqkv_ref[...],
                  preferred_element_type=jnp.float32) + bqkv_ref[...]  # f32 (Bblk*S, 3*H*d_k)
    qkv3 = qkv.reshape(batch_block, seq_len, 3 * hd)

    # ---- query-row padding mask, faithful to `scores + mask.unsqueeze(2)` ---
    # Built from SMEM de_lens (no mask DMA); hoisted out of the head loop.
    row_ids = jax.lax.broadcasted_iota(jnp.int32, (seq_len, seq_len), 0)
    masks = []
    for j in range(batch_block):                                       # static unroll (Bblk small)
        sent_len = de_lens_ref[base + j]
        masks.append(jnp.where(row_ids < sent_len, 0.0, -1.0e9).astype(jnp.float32))
    mask = jnp.stack(masks, axis=0)                                    # (Bblk, S, S)

    w0 = w0_ref[...]                                                   # bf16 (H*d_k, d_emb)
    inv_sqrt_dk = 1.0 / math.sqrt(d_k)

    # ---- per-head attention, accumulated straight into the W0 projection ----
    # No z-heads concat: acc += z_h @ W0[h-th row block].
    acc = jnp.zeros((rows, d_emb), jnp.float32)
    for h in range(num_heads):                                         # static unroll, H small
        q = qkv3[:, :, h * d_k:(h + 1) * d_k].astype(jnp.bfloat16)              # (Bblk,S,d_k)
        k = qkv3[:, :, hd + h * d_k: hd + (h + 1) * d_k].astype(jnp.bfloat16)
        v = qkv3[:, :, 2 * hd + h * d_k: 2 * hd + (h + 1) * d_k].astype(jnp.bfloat16)

        # q @ k^T, batched over the Bblk sentences (no explicit transpose).
        scores = jax.lax.dot_general(
            q, k, dimension_numbers=(((2,), (2,)), ((0,), (0,))),
            preferred_element_type=jnp.float32) * inv_sqrt_dk          # (Bblk, S, S)
        scores = scores + mask

        # Numerically-stable softmax over the key axis (f32 VPU/EUP math).
        scores = scores - jnp.max(scores, axis=-1, keepdims=True)
        p = jnp.exp(scores)
        p = p * pl.reciprocal(jnp.sum(p, axis=-1, keepdims=True), approx=True)

        z_h = jax.lax.dot_general(
            p.astype(jnp.bfloat16), v,
            dimension_numbers=(((2,), (1,)), ((0,), (0,))),
            preferred_element_type=jnp.float32)                        # (Bblk, S, d_k)

        acc = acc + jnp.dot(z_h.reshape(rows, d_k).astype(jnp.bfloat16),
                            w0[h * d_k:(h + 1) * d_k, :],
                            preferred_element_type=jnp.float32)        # (Bblk*S, d_emb)

    out = acc + b0_ref[...]
    # NOTE: d_emb=32 < 128 lanes -> masked vst; pad last dim to 128 for prod.
    out_ref[...] = out.reshape(batch_block, seq_len, d_emb)


def multihead_attention(embs, de_lens, params, *, num_heads, d_k, batch_block=None):
    """embs: (B, S, d_emb) f32, de_lens: (B,) int32. Returns (B, S, d_emb) f32."""
    B, S, d_emb = embs.shape
    hd = num_heads * d_k

    # Default: 2 grid steps when B is even (feeds both v7x TCs, negligible cost
    # on single-TC v5e/v6e); otherwise collapse to a single step.  At
    # production shapes pick batch_block so batch_block*S >= 256.
    if batch_block is None:
        batch_block = B // 2 if (B % 2 == 0 and B >= 2) else B
    assert B % batch_block == 0, "batch_block must divide the batch size"
    grid_b = B // batch_block

    # Pack per-head weights into fused, MXU-friendly matrices (once, outside
    # the kernel).  Column layout: [Q heads | K heads | V heads], head-major.
    def heads_to_cols(w):                      # (H, d_emb, d_k) -> (d_emb, H*d_k)
        return jnp.transpose(w, (1, 0, 2)).reshape(d_emb, hd)

    wqkv = jnp.concatenate([heads_to_cols(params["wq"]),
                            heads_to_cols(params["wk"]),
                            heads_to_cols(params["wv"])], axis=-1)       # (d_emb, 3*H*d_k)
    bqkv = jnp.concatenate([params["bq"].reshape(1, hd),
                            params["bk"].reshape(1, hd),
                            params["bv"].reshape(1, hd)], axis=-1)       # (1, 3*H*d_k)
    w0 = params["w0"].reshape(hd, d_emb)                                 # (H*d_k, d_emb)
    b0 = params["b0"].reshape(1, d_emb)

    # bf16 weights + bf16 activations: halves HBM->VMEM bytes; f32 accumulation
    # is requested in-kernel via preferred_element_type.  Biases stay f32.
    wqkv = wqkv.astype(jnp.bfloat16)
    w0 = w0.astype(jnp.bfloat16)
    embs_bf16 = embs.astype(jnp.bfloat16)

    cost = pl.CostEstimate(
        flops=(2 * B * S * d_emb * 3 * hd                 # fused QKV projection
               + num_heads * 4 * B * S * S * d_k          # scores + PV per head
               + 2 * B * S * hd * d_emb),                 # output projection
        transcendentals=num_heads * B * S * S,            # softmax exp
        bytes_accessed=(B * S * d_emb * (2 + 4)           # bf16 in + f32 out
                        + d_emb * 3 * hd * 2 + hd * d_emb * 2
                        + (3 * hd + d_emb) * 4 + B * 4))

    kernel = functools.partial(_mha_kernel, num_heads=num_heads, d_k=d_k,
                               seq_len=S, d_emb=d_emb, batch_block=batch_block)

    return pl.pallas_call(
        kernel,
        out_shape=jax.ShapeDtypeStruct((B, S, d_emb), jnp.float32),
        grid_spec=pltpu.PrefetchScalarGridSpec(
            num_scalar_prefetch=1,                         # de_lens -> SMEM
            grid=(grid_b,),
            in_specs=[
                pl.BlockSpec((batch_block, S, d_emb), lambda i, lens: (i, 0, 0)),  # embs
                pl.BlockSpec((d_emb, 3 * hd), lambda i, lens: (0, 0)),   # Wqkv (VMEM-resident)
                pl.BlockSpec((1, 3 * hd), lambda i, lens: (0, 0)),       # bqkv (resident)
                pl.BlockSpec((hd, d_emb), lambda i, lens: (0, 0)),       # W0   (resident)
                pl.BlockSpec((1, d_emb), lambda i, lens: (0, 0)),        # b0   (resident)
            ],
            out_specs=pl.BlockSpec((batch_block, S, d_emb), lambda i, lens: (i, 0, 0)),
        ),
        compiler_params=pltpu.CompilerParams(
            dimension_semantics=("parallel",)),            # batch blocks split across TCs
        cost_estimate=cost,
    )(de_lens, embs_bf16, wqkv, bqkv, w0, b0)


def init_params(key, num_heads, d_emb, d_k):
    """Deterministic init mirroring nn.Linear shapes (stored already transposed
    so kernels do x @ W)."""
    ks = jax.random.split(key, 9)
    u = lambda k, shape, fan_in: jax.random.uniform(
        k, shape, jnp.float32, -1.0 / math.sqrt(fan_in), 1.0 / math.sqrt(fan_in))
    return {
        "wq": u(ks[0], (num_heads, d_emb, d_k), d_emb),
        "bq": u(ks[1], (num_heads, 1, d_k), d_emb),
        "wk": u(ks[2], (num_heads, d_emb, d_k), d_emb),
        "bk": u(ks[3], (num_heads, 1, d_k), d_emb),
        "wv": u(ks[4], (num_heads, d_emb, d_k), d_emb),
        "bv": u(ks[5], (num_heads, 1, d_k), d_emb),
        # W0: Linear(d_k*H -> d_emb); store W0^T reshaped per head: (H, d_k, d_emb)
        "w0": u(ks[6], (num_heads, d_k, d_emb), d_k * num_heads),
        "b0": u(ks[7], (1, d_emb), d_k * num_heads),
    }


def reference_mha(embs, de_lens, params, *, num_heads, d_k):
    """Pure-JAX f32 reference mirroring the PyTorch forward (dropout = eval)."""
    B, S, d_emb = embs.shape
    mask = jnp.where(jnp.arange(S)[None, :] < de_lens[:, None], 0.0, -1.0e9)
    zs = []
    for h in range(num_heads):
        q = embs @ params["wq"][h] + params["bq"][h, 0]
        k = embs @ params["wk"][h] + params["bk"][h, 0]
        v = embs @ params["wv"][h] + params["bv"][h, 0]
        scores = jnp.einsum("bsd,btd->bst", q, k) / math.sqrt(d_k)
        scores = scores + mask[:, :, None]                 # query-row mask, like PyTorch
        p = jax.nn.softmax(scores, axis=-1)
        zs.append(jnp.einsum("bst,btd->bsd", p, v))
    z = jnp.concatenate(zs, axis=-1)                       # (B, S, H*d_k)
    w0_full = params["w0"].reshape(num_heads * d_k, d_emb)
    return z @ w0_full + params["b0"][0]


if __name__ == "__main__":
    B, S, d_emb, d_k, num_heads = 2, 8, 32, 16, 4

    key = jax.random.PRNGKey(0)
    k_emb, k_par = jax.random.split(key)
    embs = jax.random.normal(k_emb, (B, S, d_emb), jnp.float32)
    de_lens = jnp.array([8, 5], dtype=jnp.int32)
    params = init_params(k_par, num_heads, d_emb, d_k)

    out = multihead_attention(embs, de_lens, params,
                              num_heads=num_heads, d_k=d_k)
    out = jax.block_until_ready(out)

    ref = reference_mha(embs, de_lens, params, num_heads=num_heads, d_k=d_k)
    assert out.shape == (B, S, d_emb)
    # Kernel uses bf16 activations/weights on the MXU (f32 accumulation) and an
    # approx reciprocal in softmax; compare against the pure-f32 reference with
    # a bf16-appropriate tolerance.
    assert jnp.allclose(out, ref, atol=3e-2, rtol=3e-2), "mismatch vs reference"

    print("KERNEL_OK")
</pallas_src>

<mosaic_0001>
module attributes {stable_mosaic.version = 11 : i64} {
  func.func @_mha_kernel(%arg0: i32, %arg1: memref<2xi32, #tpu.memory_space<smem>>, %arg2: memref<1x8x32xbf16, #tpu.memory_space<vmem>>, %arg3: memref<32x192xbf16, #tpu.memory_space<vmem>>, %arg4: memref<1x192xf32, #tpu.memory_space<vmem>>, %arg5: memref<64x32xbf16, #tpu.memory_space<vmem>>, %arg6: memref<1x32xf32, #tpu.memory_space<vmem>>, %arg7: memref<1x8x32xf32, #tpu.memory_space<vmem>>) attributes {dimension_semantics = [#tpu.dimension_semantics<parallel>], iteration_bounds = array<i64: 2>, scalar_prefetch = 1 : i64, scratch_operands = 0 : i64, tpu.core_type = #tpu.core_type<tc>, window_params = [{transform_indices = @transform_0, window_bounds = array<i64: 1, 8, 32>}, {pipeline_mode = #tpu.pipeline_mode<synchronous>, transform_indices = @transform_1, window_bounds = array<i64: 32, 192>}, {pipeline_mode = #tpu.pipeline_mode<synchronous>, transform_indices = @transform_2, window_bounds = array<i64: 1, 192>}, {pipeline_mode = #tpu.pipeline_mode<synchronous>, transform_indices = @transform_3, window_bounds = array<i64: 64, 32>}, {pipeline_mode = #tpu.pipeline_mode<synchronous>, transform_indices = @transform_4, window_bounds = array<i64: 1, 32>}, {transform_indices = @transform_5, window_bounds = array<i64: 1, 8, 32>}]} {
    %c1_i32 = arith.constant 1 : i32
    %0 = arith.muli %arg0, %c1_i32 : i32
    %c0 = arith.constant 0 : index
    %c0_0 = arith.constant 0 : index
    %c0_1 = arith.constant 0 : index
    %1 = vector.load %arg2[%c0, %c0_0, %c0_1] : memref<1x8x32xbf16, #tpu.memory_space<vmem>>, vector<1x8x32xbf16>
    %2 = vector.shape_cast %1 : vector<1x8x32xbf16> to vector<8x32xbf16>
    %c0_2 = arith.constant 0 : index
    %c0_3 = arith.constant 0 : index
    %3 = vector.load %arg3[%c0_2, %c0_3] : memref<32x192xbf16, #tpu.memory_space<vmem>>, vector<32x192xbf16>
    %cst = arith.constant dense<0.000000e+00> : vector<8x192xf32>
    %4 = tpu.matmul %2, %3, %cst {dimension_numbers = #tpu.dot_dimension_numbers<[1], [0], [0], [1], [0, 0, 1, 1], [], []>} : vector<8x32xbf16>, vector<32x192xbf16>, vector<8x192xf32> -> vector<8x192xf32>
    %c0_4 = arith.constant 0 : index
    %c0_5 = arith.constant 0 : index
    %5 = vector.load %arg4[%c0_4, %c0_5] : memref<1x192xf32, #tpu.memory_space<vmem>>, vector<1x192xf32>
    %6 = vector.broadcast %5 : vector<1x192xf32> to vector<8x192xf32>
    %7 = arith.addf %4, %6 : vector<8x192xf32>
    %8 = vector.shape_cast %7 : vector<8x192xf32> to vector<1x8x192xf32>
    %9 = tpu.iota {dimensions = array<i32: 0>} : vector<8x8xi32>
    %c0_i32 = arith.constant 0 : i32
    %10 = arith.addi %0, %c0_i32 : i32
    %11 = arith.index_cast %10 : i32 to index
    %12 = memref.load %arg1[%11] : memref<2xi32, #tpu.memory_space<smem>>
    %13 = vector.broadcast %12 : i32 to vector<8x8xi32>
    %14 = arith.cmpi slt, %9, %13 : vector<8x8xi32>
    %cst_6 = arith.constant 0.000000e+00 : f32
    %cst_7 = arith.constant -1.000000e+09 : f32
    %15 = vector.broadcast %cst_6 : f32 to vector<8x8xf32>
    %16 = vector.broadcast %cst_7 : f32 to vector<8x8xf32>
    %17 = arith.select %14, %15, %16 : vector<8x8xi1>, vector<8x8xf32>
    %18 = vector.shape_cast %17 : vector<8x8xf32> to vector<1x8x8xf32>
    %c0_8 = arith.constant 0 : index
    %c0_9 = arith.constant 0 : index
    %19 = vector.load %arg5[%c0_8, %c0_9] : memref<64x32xbf16, #tpu.memory_space<vmem>>, vector<64x32xbf16>
    %cst_10 = arith.constant 0.000000e+00 : f32
    %20 = vector.broadcast %cst_10 : f32 to vector<8x32xf32>
    %21 = vector.extract_strided_slice %8 {offsets = [0, 0, 0], sizes = [1, 8, 16], strides = [1, 1, 1]} : vector<1x8x192xf32> to vector<1x8x16xf32>
    %22 = arith.truncf %21 : vector<1x8x16xf32> to vector<1x8x16xbf16>
    %23 = vector.extract_strided_slice %8 {offsets = [0, 0, 64], sizes = [1, 8, 16], strides = [1, 1, 1]} : vector<1x8x192xf32> to vector<1x8x16xf32>
    %24 = arith.truncf %23 : vector<1x8x16xf32> to vector<1x8x16xbf16>
    %25 = vector.extract_strided_slice %8 {offsets = [0, 0, 128], sizes = [1, 8, 16], strides = [1, 1, 1]} : vector<1x8x192xf32> to vector<1x8x16xf32>
    %26 = arith.truncf %25 : vector<1x8x16xf32> to vector<1x8x16xbf16>
    %cst_11 = arith.constant dense<0.000000e+00> : vector<1x8x8xf32>
    %27 = tpu.matmul %22, %24, %cst_11 {dimension_numbers = #tpu.dot_dimension_numbers<[2], [2], [1], [1], [0, 0, 0, 1, 1, 1], [0], [0]>} : vector<1x8x16xbf16>, vector<1x8x16xbf16>, vector<1x8x8xf32> -> vector<1x8x8xf32>
    %cst_12 = arith.constant 2.500000e-01 : f32
    %28 = vector.broadcast %cst_12 : f32 to vector<1x8x8xf32>
    %29 = arith.mulf %27, %28 : vector<1x8x8xf32>
    %30 = arith.addf %29, %18 : vector<1x8x8xf32>
    %cst_13 = arith.constant dense<0xFF800000> : vector<1x8xf32>
    %31 = vector.multi_reduction <maximumf>, %30, %cst_13 [2] : vector<1x8x8xf32> to vector<1x8xf32>
    %32 = vector.shape_cast %31 : vector<1x8xf32> to vector<1x8x1xf32>
    %33 = vector.broadcast %32 : vector<1x8x1xf32> to vector<1x8x8xf32>
    %34 = arith.subf %30, %33 : vector<1x8x8xf32>
    %35 = math.exp %34 : vector<1x8x8xf32>
    %cst_14 = arith.constant dense<0.000000e+00> : vector<1x8xf32>
    %36 = vector.multi_reduction <add>, %35, %cst_14 [2] : vector<1x8x8xf32> to vector<1x8xf32>
    %37 = vector.shape_cast %36 : vector<1x8xf32> to vector<1x8x1xf32>
    %38 = tpu.reciprocal %37 {approx = true} : vector<1x8x1xf32> -> vector<1x8x1xf32>
    %39 = vector.broadcast %38 : vector<1x8x1xf32> to vector<1x8x8xf32>
    %40 = arith.mulf %35, %39 : vector<1x8x8xf32>
    %41 = arith.truncf %40 : vector<1x8x8xf32> to vector<1x8x8xbf16>
    %cst_15 = arith.constant dense<0.000000e+00> : vector<1x8x16xf32>
    %42 = tpu.matmul %41, %26, %cst_15 {dimension_numbers = #tpu.dot_dimension_numbers<[2], [1], [1], [2], [0, 0, 0, 1, 1, 2], [0], [0]>} : vector<1x8x8xbf16>, vector<1x8x16xbf16>, vector<1x8x16xf32> -> vector<1x8x16xf32>
    %43 = vector.shape_cast %42 : vector<1x8x16xf32> to vector<8x16xf32>
    %44 = arith.truncf %43 : vector<8x16xf32> to vector<8x16xbf16>
    %45 = vector.extract_strided_slice %19 {offsets = [0, 0], sizes = [16, 32], strides = [1, 1]} : vector<64x32xbf16> to vector<16x32xbf16>
    %cst_16 = arith.constant dense<0.000000e+00> : vector<8x32xf32>
    %46 = tpu.matmul %44, %45, %cst_16 {dimension_numbers = #tpu.dot_dimension_numbers<[1], [0], [0], [1], [0, 0, 1, 1], [], []>} : vector<8x16xbf16>, vector<16x32xbf16>, vector<8x32xf32> -> vector<8x32xf32>
    %47 = arith.addf %20, %46 : vector<8x32xf32>
    %48 = vector.extract_strided_slice %8 {offsets = [0, 0, 16], sizes = [1, 8, 16], strides = [1, 1, 1]} : vector<1x8x192xf32> to vector<1x8x16xf32>
    %49 = arith.truncf %48 : vector<1x8x16xf32> to vector<1x8x16xbf16>
    %50 = vector.extract_strided_slice %8 {offsets = [0, 0, 80], sizes = [1, 8, 16], strides = [1, 1, 1]} : vector<1x8x192xf32> to vector<1x8x16xf32>
    %51 = arith.truncf %50 : vector<1x8x16xf32> to vector<1x8x16xbf16>
    %52 = vector.extract_strided_slice %8 {offsets = [0, 0, 144], sizes = [1, 8, 16], strides = [1, 1, 1]} : vector<1x8x192xf32> to vector<1x8x16xf32>
    %53 = arith.truncf %52 : vector<1x8x16xf32> to vector<1x8x16xbf16>
    %cst_17 = arith.constant dense<0.000000e+00> : vector<1x8x8xf32>
    %54 = tpu.matmul %49, %51, %cst_17 {dimension_numbers = #tpu.dot_dimension_numbers<[2], [2], [1], [1], [0, 0, 0, 1, 1, 1], [0], [0]>} : vector<1x8x16xbf16>, vector<1x8x16xbf16>, vector<1x8x8xf32> -> vector<1x8x8xf32>
    %cst_18 = arith.constant 2.500000e-01 : f32
    %55 = vector.broadcast %cst_18 : f32 to vector<1x8x8xf32>
    %56 = arith.mulf %54, %55 : vector<1x8x8xf32>
    %57 = arith.addf %56, %18 : vector<1x8x8xf32>
    %cst_19 = arith.constant dense<0xFF800000> : vector<1x8xf32>
    %58 = vector.multi_reduction <maximumf>, %57, %cst_19 [2] : vector<1x8x8xf32> to vector<1x8xf32>
    %59 = vector.shape_cast %58 : vector<1x8xf32> to vector<1x8x1xf32>
    %60 = vector.broadcast %59 : vector<1x8x1xf32> to vector<1x8x8xf32>
    %61 = arith.subf %57, %60 : vector<1x8x8xf32>
    %62 = math.exp %61 : vector<1x8x8xf32>
    %cst_20 = arith.constant dense<0.000000e+00> : vector<1x8xf32>
    %63 = vector.multi_reduction <add>, %62, %cst_20 [2] : vector<1x8x8xf32> to vector<1x8xf32>
    %64 = vector.shape_cast %63 : vector<1x8xf32> to vector<1x8x1xf32>
    %65 = tpu.reciprocal %64 {approx = true} : vector<1x8x1xf32> -> vector<1x8x1xf32>
    %66 = vector.broadcast %65 : vector<1x8x1xf32> to vector<1x8x8xf32>
    %67 = arith.mulf %62, %66 : vector<1x8x8xf32>
    %68 = arith.truncf %67 : vector<1x8x8xf32> to vector<1x8x8xbf16>
    %cst_21 = arith.constant dense<0.000000e+00> : vector<1x8x16xf32>
    %69 = tpu.matmul %68, %53, %cst_21 {dimension_numbers = #tpu.dot_dimension_numbers<[2], [1], [1], [2], [0, 0, 0, 1, 1, 2], [0], [0]>} : vector<1x8x8xbf16>, vector<1x8x16xbf16>, vector<1x8x16xf32> -> vector<1x8x16xf32>
    %70 = vector.shape_cast %69 : vector<1x8x16xf32> to vector<8x16xf32>
    %71 = arith.truncf %70 : vector<8x16xf32> to vector<8x16xbf16>
    %72 = vector.extract_strided_slice %19 {offsets = [16, 0], sizes = [16, 32], strides = [1, 1]} : vector<64x32xbf16> to vector<16x32xbf16>
    %cst_22 = arith.constant dense<0.000000e+00> : vector<8x32xf32>
    %73 = tpu.matmul %71, %72, %cst_22 {dimension_numbers = #tpu.dot_dimension_numbers<[1], [0], [0], [1], [0, 0, 1, 1], [], []>} : vector<8x16xbf16>, vector<16x32xbf16>, vector<8x32xf32> -> vector<8x32xf32>
    %74 = arith.addf %47, %73 : vector<8x32xf32>
    %75 = vector.extract_strided_slice %8 {offsets = [0, 0, 32], sizes = [1, 8, 16], strides = [1, 1, 1]} : vector<1x8x192xf32> to vector<1x8x16xf32>
    %76 = arith.truncf %75 : vector<1x8x16xf32> to vector<1x8x16xbf16>
    %77 = vector.extract_strided_slice %8 {offsets = [0, 0, 96], sizes = [1, 8, 16], strides = [1, 1, 1]} : vector<1x8x192xf32> to vector<1x8x16xf32>
    %78 = arith.truncf %77 : vector<1x8x16xf32> to vector<1x8x16xbf16>
    %79 = vector.extract_strided_slice %8 {offsets = [0, 0, 160], sizes = [1, 8, 16], strides = [1, 1, 1]} : vector<1x8x192xf32> to vector<1x8x16xf32>
    %80 = arith.truncf %79 : vector<1x8x16xf32> to vector<1x8x16xbf16>
    %cst_23 = arith.constant dense<0.000000e+00> : vector<1x8x8xf32>
    %81 = tpu.matmul %76, %78, %cst_23 {dimension_numbers = #tpu.dot_dimension_numbers<[2], [2], [1], [1], [0, 0, 0, 1, 1, 1], [0], [0]>} : vector<1x8x16xbf16>, vector<1x8x16xbf16>, vector<1x8x8xf32> -> vector<1x8x8xf32>
    %cst_24 = arith.constant 2.500000e-01 : f32
    %82 = vector.broadcast %cst_24 : f32 to vector<1x8x8xf32>
    %83 = arith.mulf %81, %82 : vector<1x8x8xf32>
    %84 = arith.addf %83, %18 : vector<1x8x8xf32>
    %cst_25 = arith.constant dense<0xFF800000> : vector<1x8xf32>
    %85 = vector.multi_reduction <maximumf>, %84, %cst_25 [2] : vector<1x8x8xf32> to vector<1x8xf32>
    %86 = vector.shape_cast %85 : vector<1x8xf32> to vector<1x8x1xf32>
    %87 = vector.broadcast %86 : vector<1x8x1xf32> to vector<1x8x8xf32>
    %88 = arith.subf %84, %87 : vector<1x8x8xf32>
    %89 = math.exp %88 : vector<1x8x8xf32>
    %cst_26 = arith.constant dense<0.000000e+00> : vector<1x8xf32>
    %90 = vector.multi_reduction <add>, %89, %cst_26 [2] : vector<1x8x8xf32> to vector<1x8xf32>
    %91 = vector.shape_cast %90 : vector<1x8xf32> to vector<1x8x1xf32>
    %92 = tpu.reciprocal %91 {approx = true} : vector<1x8x1xf32> -> vector<1x8x1xf32>
    %93 = vector.broadcast %92 : vector<1x8x1xf32> to vector<1x8x8xf32>
    %94 = arith.mulf %89, %93 : vector<1x8x8xf32>
    %95 = arith.truncf %94 : vector<1x8x8xf32> to vector<1x8x8xbf16>
    %cst_27 = arith.constant dense<0.000000e+00> : vector<1x8x16xf32>
    %96 = tpu.matmul %95, %80, %cst_27 {dimension_numbers = #tpu.dot_dimension_numbers<[2], [1], [1], [2], [0, 0, 0, 1, 1, 2], [0], [0]>} : vector<1x8x8xbf16>, vector<1x8x16xbf16>, vector<1x8x16xf32> -> vector<1x8x16xf32>
    %97 = vector.shape_cast %96 : vector<1x8x16xf32> to vector<8x16xf32>
    %98 = arith.truncf %97 : vector<8x16xf32> to vector<8x16xbf16>
    %99 = vector.extract_strided_slice %19 {offsets = [32, 0], sizes = [16, 32], strides = [1, 1]} : vector<64x32xbf16> to vector<16x32xbf16>
    %cst_28 = arith.constant dense<0.000000e+00> : vector<8x32xf32>
    %100 = tpu.matmul %98, %99, %cst_28 {dimension_numbers = #tpu.dot_dimension_numbers<[1], [0], [0], [1], [0, 0, 1, 1], [], []>} : vector<8x16xbf16>, vector<16x32xbf16>, vector<8x32xf32> -> vector<8x32xf32>
    %101 = arith.addf %74, %100 : vector<8x32xf32>
    %102 = vector.extract_strided_slice %8 {offsets = [0, 0, 48], sizes = [1, 8, 16], strides = [1, 1, 1]} : vector<1x8x192xf32> to vector<1x8x16xf32>
    %103 = arith.truncf %102 : vector<1x8x16xf32> to vector<1x8x16xbf16>
    %104 = vector.extract_strided_slice %8 {offsets = [0, 0, 112], sizes = [1, 8, 16], strides = [1, 1, 1]} : vector<1x8x192xf32> to vector<1x8x16xf32>
    %105 = arith.truncf %104 : vector<1x8x16xf32> to vector<1x8x16xbf16>
    %106 = vector.extract_strided_slice %8 {offsets = [0, 0, 176], sizes = [1, 8, 16], strides = [1, 1, 1]} : vector<1x8x192xf32> to vector<1x8x16xf32>
    %107 = arith.truncf %106 : vector<1x8x16xf32> to vector<1x8x16xbf16>
    %cst_29 = arith.constant dense<0.000000e+00> : vector<1x8x8xf32>
    %108 = tpu.matmul %103, %105, %cst_29 {dimension_numbers = #tpu.dot_dimension_numbers<[2], [2], [1], [1], [0, 0, 0, 1, 1, 1], [0], [0]>} : vector<1x8x16xbf16>, vector<1x8x16xbf16>, vector<1x8x8xf32> -> vector<1x8x8xf32>
    %cst_30 = arith.constant 2.500000e-01 : f32
    %109 = vector.broadcast %cst_30 : f32 to vector<1x8x8xf32>
    %110 = arith.mulf %108, %109 : vector<1x8x8xf32>
    %111 = arith.addf %110, %18 : vector<1x8x8xf32>
    %cst_31 = arith.constant dense<0xFF800000> : vector<1x8xf32>
    %112 = vector.multi_reduction <maximumf>, %111, %cst_31 [2] : vector<1x8x8xf32> to vector<1x8xf32>
    %113 = vector.shape_cast %112 : vector<1x8xf32> to vector<1x8x1xf32>
    %114 = vector.broadcast %113 : vector<1x8x1xf32> to vector<1x8x8xf32>
    %115 = arith.subf %111, %114 : vector<1x8x8xf32>
    %116 = math.exp %115 : vector<1x8x8xf32>
    %cst_32 = arith.constant dense<0.000000e+00> : vector<1x8xf32>
    %117 = vector.multi_reduction <add>, %116, %cst_32 [2] : vector<1x8x8xf32> to vector<1x8xf32>
    %118 = vector.shape_cast %117 : vector<1x8xf32> to vector<1x8x1xf32>
    %119 = tpu.reciprocal %118 {approx = true} : vector<1x8x1xf32> -> vector<1x8x1xf32>
    %120 = vector.broadcast %119 : vector<1x8x1xf32> to vector<1x8x8xf32>
    %121 = arith.mulf %116, %120 : vector<1x8x8xf32>
    %122 = arith.truncf %121 : vector<1x8x8xf32> to vector<1x8x8xbf16>
    %cst_33 = arith.constant dense<0.000000e+00> : vector<1x8x16xf32>
    %123 = tpu.matmul %122, %107, %cst_33 {dimension_numbers = #tpu.dot_dimension_numbers<[2], [1], [1], [2], [0, 0, 0, 1, 1, 2], [0], [0]>} : vector<1x8x8xbf16>, vector<1x8x16xbf16>, vector<1x8x16xf32> -> vector<1x8x16xf32>
    %124 = vector.shape_cast %123 : vector<1x8x16xf32> to vector<8x16xf32>
    %125 = arith.truncf %124 : vector<8x16xf32> to vector<8x16xbf16>
    %126 = vector.extract_strided_slice %19 {offsets = [48, 0], sizes = [16, 32], strides = [1, 1]} : vector<64x32xbf16> to vector<16x32xbf16>
    %cst_34 = arith.constant dense<0.000000e+00> : vector<8x32xf32>
    %127 = tpu.matmul %125, %126, %cst_34 {dimension_numbers = #tpu.dot_dimension_numbers<[1], [0], [0], [1], [0, 0, 1, 1], [], []>} : vector<8x16xbf16>, vector<16x32xbf16>, vector<8x32xf32> -> vector<8x32xf32>
    %128 = arith.addf %101, %127 : vector<8x32xf32>
    %c0_35 = arith.constant 0 : index
    %c0_36 = arith.constant 0 : index
    %129 = vector.load %arg6[%c0_35, %c0_36] : memref<1x32xf32, #tpu.memory_space<vmem>>, vector<1x32xf32>
    %130 = vector.broadcast %129 : vector<1x32xf32> to vector<8x32xf32>
    %131 = arith.addf %128, %130 : vector<8x32xf32>
    %132 = vector.shape_cast %131 : vector<8x32xf32> to vector<1x8x32xf32>
    %c0_37 = arith.constant 0 : index
    %c0_38 = arith.constant 0 : index
    %c0_39 = arith.constant 0 : index
    %133 = vector.load %arg7[%c0_37, %c0_38, %c0_39] : memref<1x8x32xf32, #tpu.memory_space<vmem>>, vector<1x8x32xf32>
    tpu.vector_store %arg7[%c0_37, %c0_38, %c0_39], %132 {strides = array<i32>} : memref<1x8x32xf32, #tpu.memory_space<vmem>>, vector<1x8x32xf32>,
    return
  }
  func.func @transform_0(%arg0: i32, %arg1: memref<2xi32, #tpu.memory_space<smem>>) -> (i32, i32, i32) {
    %c0_i32 = arith.constant 0 : i32
    %c0_i32_0 = arith.constant 0 : i32
    %c0_i32_1 = arith.constant 0 : i32
    return %arg0, %c0_i32, %c0_i32_0 : i32, i32, i32
  }
  func.func @transform_1(%arg0: i32, %arg1: memref<2xi32, #tpu.memory_space<smem>>) -> (i32, i32) {
    %c0_i32 = arith.constant 0 : i32
    %c0_i32_0 = arith.constant 0 : i32
    %c0_i32_1 = arith.constant 0 : i32
    return %c0_i32, %c0_i32_0 : i32, i32
  }
  func.func @transform_2(%arg0: i32, %arg1: memref<2xi32, #tpu.memory_space<smem>>) -> (i32, i32) {
    %c0_i32 = arith.constant 0 : i32
    %c0_i32_0 = arith.constant 0 : i32
    %c0_i32_1 = arith.constant 0 : i32
    return %c0_i32, %c0_i32_0 : i32, i32
  }
  func.func @transform_3(%arg0: i32, %arg1: memref<2xi32, #tpu.memory_space<smem>>) -> (i32, i32) {
    %c0_i32 = arith.constant 0 : i32
    %c0_i32_0 = arith.constant 0 : i32
    %c0_i32_1 = arith.constant 0 : i32
    return %c0_i32, %c0_i32_0 : i32, i32
  }
  func.func @transform_4(%arg0: i32, %arg1: memref<2xi32, #tpu.memory_space<smem>>) -> (i32, i32) {
    %c0_i32 = arith.constant 0 : i32
    %c0_i32_0 = arith.constant 0 : i32
    %c0_i32_1 = arith.constant 0 : i32
    return %c0_i32, %c0_i32_0 : i32, i32
  }
  func.func @transform_5(%arg0: i32, %arg1: memref<2xi32, #tpu.memory_space<smem>>) -> (i32, i32, i32) {
    %c0_i32 = arith.constant 0 : i32
    %c0_i32_0 = arith.constant 0 : i32
    %c0_i32_1 = arith.constant 0 : i32
    return %arg0, %c0_i32, %c0_i32_0 : i32, i32, i32
  }
}

</mosaic_0001>

<llo_original>
// kernel: tpu_custom_call.1
$region0: #{tpu_custom_call.1}
  #allocation0 [shape = 'u32[]', space=smem, size = 0x4, offset = 0x4, fixed_abs, tag = 'smem constant byte address 0x4 - core index']
  #allocation1 [shape = 'u32[144,128]{1,0:T(1,128)}', space=vmem, size = 0x12000, scoped, tag = 'internal scratch']
  #allocation2 [shape = 's32[1]{0}', space=sflag, size = 0x4, scoped, tag = 'scoped memory for tpu_custom_call.1']
  #allocation3 [shape = 'u8[512]{0}', space=smem, size = 0x200, scoped, tag = 'prefetched SMEM operand 0']
  %s0 = inlined_call_operand.vmem [shape: s32[2], index: 0, kind: input, shape index: {}]
  %s1 = inlined_call_operand.vmem [shape: bf16[2,8,32], index: 1, kind: input, shape index: {}]
  %s2 = inlined_call_operand.vmem [shape: bf16[32,192], index: 2, kind: input, shape index: {}]
  %s3 = inlined_call_operand.vmem [shape: f32[1,192], index: 3, kind: input, shape index: {}]
  %s4 = inlined_call_operand.vmem [shape: bf16[64,32], index: 4, kind: input, shape index: {}]
  %s5 = inlined_call_operand.vmem [shape: f32[1,32], index: 5, kind: input, shape index: {}]
  %s6 = inlined_call_operand.hbm [shape: f32[2,8,32], index: 6, kind: output, shape index: {}]
  %s7 = sld [smem:[#allocation0]]
  $region53: #{tpu_custom_call.1} parent=0
    _
  %s9 = ssub.s32 1, %s7
  %s10 = scalar_select 0, %s9, %s7
  %s11 = sshll.u32 %s0, 4
  %s12 = int_to_ptr.vmem [resolvable:$true] %s11
  %14 = dma.vmem_to_smem %s12, 16, [#allocation3], [#allocation2]
  %15 = dma.done [#allocation2], 16
  %16 = sfence
  $region1: #{tpu_custom_call.1} parent=0
    #allocation4 [shape = 'u8[8192]{0}', space=vmem, size = 0x2000, scoped, tag = 'output window, operand 0']
    #allocation5 [shape = 's32[2]{0}', space=sflag, size = 0x8, scoped, tag = 'scoped memory for tpu_custom_call.1']
    %17 = vsyncpa [#allocation5], 0
    %s18 = scalar_lea.sflag [#allocation5], 1
    %19 = vsyncpa %s18, 0
    loop: start=0, step=1, limit=4
    $region2: #{tpu_custom_call.1} parent=1 // loop_pre_header
      _
    $region3: #{tpu_custom_call.1} parent=1 // loop_header
      %s21 = sphi 0, %s25
      %p22 = scmp.ge.s32.totalorder %s21, 4
      %s31 = sphi 0, %s33
      %s34 = sphi 0, %s31
      %s35 = sphi 0, %s34
      %s51 = sphi 0, %s35
      %s55 = sphi 0, %s55
      %s57 = sphi 0, %s55
      %s58 = sphi 0, %s57
      %s72 = sphi 0, %s58
      %s76 = sphi 0, %s76
      %s78 = sphi 0, %s76
      %s79 = sphi 0, %s78
      %s93 = sphi 0, %s79
      %s97 = sphi 0, %s97
      %s99 = sphi 0, %s97
      %s100 = sphi 0, %s99
      %s114 = sphi 0, %s100
      %s118 = sphi 0, %s118
      %s120 = sphi 0, %s118
      %s121 = sphi 0, %s120
      %s135 = sphi 0, %s121
      %s141 = sphi 0, %s143
      %s144 = sphi 0, %s141
      %s145 = sphi 0, %s144
      %s161 = sphi 0, %s145
    $region4: #{tpu_custom_call.1} parent=1 // loop_header_branch
      %24 = sbr.rel (%p22) target = $region8
    $region5: #{tpu_custom_call.1} parent=1 // loop_body
      %s26 = ssub.s32 %s21, 1
      %s27 = ssub.s32 %s21, 2
      %s28 = sadd.s32 %s21, 1
      %s29 = ssub.s32 %s21, %s28
      %p30 = scmp.eq.s32.totalorder %s29, 0
      %s32 = sadd.s32 %s31, 1
      %s33 = scalar_select %p30, %s31, %s32
      %p36 = pneg %p30
      %p37 = scmp.eq.s32.totalorder %s21, 1
      %p38 = por %p36, %p37
      %p39 = scmp.ne.s32.totalorder %s31, %s34
      %p40 = scmp.eq.s32.totalorder %s21, 0
      %p41 = por %p39, %p40
      %p42 = scmp.ne.s32.totalorder %s31, %s34
      %p43 = scmp.eq.s32.totalorder %s26, 1
      %p44 = por %p42, %p43
      %p45 = scmp.ne.s32.totalorder %s34, %s35
      %p46 = scmp.eq.s32.totalorder %s26, 0
      %p47 = por %p45, %p46
      %p48 = scmp.ne.s32.totalorder %s34, %s35
      %p49 = scmp.eq.s32.totalorder %s27, 1
      %p50 = por %p48, %p49
      %p52 = scmp.ne.s32.totalorder %s35, %s51
      %p53 = scmp.eq.s32.totalorder %s27, 0
      %p54 = por %p52, %p53
      %s56 = sadd.s32 %s55, 1
      %p59 = scmp.eq.s32.totalorder %s21, 1
      %p60 = scmp.ne.s32.totalorder %s55, %s57
      %p61 = scmp.eq.s32.totalorder %s21, 0
      %p62 = por %p60, %p61
      %p63 = scmp.ne.s32.totalorder %s55, %s57
      %p64 = scmp.eq.s32.totalorder %s26, 1
      %p65 = por %p63, %p64
      %p66 = scmp.ne.s32.totalorder %s57, %s58
      %p67 = scmp.eq.s32.totalorder %s26, 0
      %p68 = por %p66, %p67
      %p69 = scmp.ne.s32.totalorder %s57, %s58
      %p70 = scmp.eq.s32.totalorder %s27, 1
      %p71 = por %p69, %p70
      %p73 = scmp.ne.s32.totalorder %s58, %s72
      %p74 = scmp.eq.s32.totalorder %s27, 0
      %p75 = por %p73, %p74
      %s77 = sadd.s32 %s76, 1
      %p80 = scmp.eq.s32.totalorder %s21, 1
      %p81 = scmp.ne.s32.totalorder %s76, %s78
      %p82 = scmp.eq.s32.totalorder %s21, 0
      %p83 = por %p81, %p82
      %p84 = scmp.ne.s32.totalorder %s76, %s78
      %p85 = scmp.eq.s32.totalorder %s26, 1
      %p86 = por %p84, %p85
      %p87 = scmp.ne.s32.totalorder %s78, %s79
      %p88 = scmp.eq.s32.totalorder %s26, 0
      %p89 = por %p87, %p88
      %p90 = scmp.ne.s32.totalorder %s78, %s79
      %p91 = scmp.eq.s32.totalorder %s27, 1
      %p92 = por %p90, %p91
      %p94 = scmp.ne.s32.totalorder %s79, %s93
      %p95 = scmp.eq.s32.totalorder %s27, 0
      %p96 = por %p94, %p95
      %s98 = sadd.s32 %s97, 1
      %p101 = scmp.eq.s32.totalorder %s21, 1
      %p102 = scmp.ne.s32.totalorder %s97, %s99
      %p103 = scmp.eq.s32.totalorder %s21, 0
      %p104 = por %p102, %p103
      %p105 = scmp.ne.s32.totalorder %s97, %s99
      %p106 = scmp.eq.s32.totalorder %s26, 1
      %p107 = por %p105, %p106
      %p108 = scmp.ne.s32.totalorder %s99, %s100
      %p109 = scmp.eq.s32.totalorder %s26, 0
      %p110 = por %p108, %p109
      %p111 = scmp.ne.s32.totalorder %s99, %s100
      %p112 = scmp.eq.s32.totalorder %s27, 1
      %p113 = por %p111, %p112
      %p115 = scmp.ne.s32.totalorder %s100, %s114
      %p116 = scmp.eq.s32.totalorder %s27, 0
      %p117 = por %p115, %p116
      %s119 = sadd.s32 %s118, 1
      %p122 = scmp.eq.s32.totalorder %s21, 1
      %p123 = scmp.ne.s32.totalorder %s118, %s120
      %p124 = scmp.eq.s32.totalorder %s21, 0
      %p125 = por %p123, %p124
      %p126 = scmp.ne.s32.totalorder %s118, %s120
      %p127 = scmp.eq.s32.totalorder %s26, 1
      %p128 = por %p126, %p127
      %p129 = scmp.ne.s32.totalorder %s120, %s121
      %p130 = scmp.eq.s32.totalorder %s26, 0
      %p131 = por %p129, %p130
      %p132 = scmp.ne.s32.totalorder %s120, %s121
      %p133 = scmp.eq.s32.totalorder %s27, 1
      %p134 = por %p132, %p133
      %p136 = scmp.ne.s32.totalorder %s121, %s135
      %p137 = scmp.eq.s32.totalorder %s27, 0
      %p138 = por %p136, %p137
      %s139 = ssub.s32 %s21, %s28
      %p140 = scmp.eq.s32.totalorder %s139, 0
      %s142 = sadd.s32 %s141, 1
      %s143 = scalar_select %p140, %s141, %s142
      %p146 = pneg %p140
      %p147 = scmp.eq.s32.totalorder %s21, 1
      %p148 = por %p146, %p147
      %p149 = scmp.ne.s32.totalorder %s141, %s144
      %p150 = scmp.eq.s32.totalorder %s21, 0
      %p151 = por %p149, %p150
      %p152 = scmp.ne.s32.totalorder %s141, %s144
      %p153 = scmp.eq.s32.totalorder %s26, 1
      %p154 = por %p152, %p153
      %p155 = scmp.ne.s32.totalorder %s144, %s145
      %p156 = scmp.eq.s32.totalorder %s26, 0
      %p157 = por %p155, %p156
      %p158 = scmp.ne.s32.totalorder %s144, %s145
      %p159 = scmp.eq.s32.totalorder %s27, 1
      %p160 = por %p158, %p159
      %p162 = scmp.ne.s32.totalorder %s145, %s161
      %p163 = scmp.eq.s32.totalorder %s27, 0
      %p164 = por %p162, %p163
      %p165 = scmp.le.s32.totalorder 1, %s21
      %p166 = scmp.lt.s32.totalorder %s21, 3
      %p167 = pnand %p165, %p166
      %p168 = pneg %p167
      // Predicated region
      $region9: #{tpu_custom_call.1} parent=5 // pred_check
        _
      $region10: #{tpu_custom_call.1} parent=5 // pred_check_branch
        %170 = sbr.rel (%p167) target = $region12
      $region11: #{tpu_custom_call.1} parent=5 // pred_region
        %s171 = ssub.s32 %s21, 1
        // Predicated region
        $region13: #{tpu_custom_call.1} parent=11 // pred_check
          %p172 = pneg %p68
        $region14: #{tpu_custom_call.1} parent=11 // pred_check_branch
          %174 = sbr.rel (%p172) target = $region16
        $region15: #{tpu_custom_call.1} parent=11 // pred_region
          _
        $region16: #{tpu_custom_call.1} parent=11 // pred_fallthru
          _
        // Predicated region
        $region17: #{tpu_custom_call.1} parent=11 // pred_check
          %p175 = pneg %p89
        $region18: #{tpu_custom_call.1} parent=11 // pred_check_branch
          %177 = sbr.rel (%p175) target = $region20
        $region19: #{tpu_custom_call.1} parent=11 // pred_region
          _
        $region20: #{tpu_custom_call.1} parent=11 // pred_fallthru
          _
        // Predicated region
        $region21: #{tpu_custom_call.1} parent=11 // pred_check
          %p178 = pneg %p110
        $region22: #{tpu_custom_call.1} parent=11 // pred_check_branch
          %180 = sbr.rel (%p178) target = $region24
        $region23: #{tpu_custom_call.1} parent=11 // pred_region
          _
        $region24: #{tpu_custom_call.1} parent=11 // pred_fallthru
          _
        // Predicated region
        $region25: #{tpu_custom_call.1} parent=11 // pred_check
          %p181 = pneg %p131
        $region26: #{tpu_custom_call.1} parent=11 // pred_check_branch
          %183 = sbr.rel (%p181) target = $region28
        $region27: #{tpu_custom_call.1} parent=11 // pred_region
          _
        $region28: #{tpu_custom_call.1} parent=11 // pred_fallthru
          _
      $region12: #{tpu_custom_call.1} parent=5 // pred_fallthru
        _
      %p184 = scmp.lt.s32.totalorder %s21, 2
      // Predicated region
      $region29: #{tpu_custom_call.1} parent=5 // pred_check
        %p185 = pneg %p184
      $region30: #{tpu_custom_call.1} parent=5 // pred_check_branch
        %187 = sbr.rel (%p185) target = $region32
      $region31: #{tpu_custom_call.1} parent=5 // pred_region
        // Predicated region
        $region33: #{tpu_custom_call.1} parent=31 // pred_check
          %p188 = pneg %p41
        $region34: #{tpu_custom_call.1} parent=31 // pred_check_branch
          %190 = sbr.rel (%p188) target = $region36
        $region35: #{tpu_custom_call.1} parent=31 // pred_region
          %p191 = scmp.lt.s32.totalorder %s21, 1
          %s192 = scalar_select %p191, %s21, 1
          %s193 = smul.addr %s192, 4
          %s194 = scalar_lea.vmem %s1, %s193
        $region36: #{tpu_custom_call.1} parent=31 // pred_fallthru
          _
      $region32: #{tpu_custom_call.1} parent=5 // pred_fallthru
        _
      %p195 = scmp.le.s32.totalorder 1, %s21
      %p196 = scmp.lt.s32.totalorder %s21, 3
      %p197 = pnand %p195, %p196
      %p198 = pneg %p197
      // Predicated region
      $region37: #{tpu_custom_call.1} parent=5 // pred_check
        _
      $region38: #{tpu_custom_call.1} parent=5 // pred_check_branch
        %200 = sbr.rel (%p197) target = $region40
      $region39: #{tpu_custom_call.1} parent=5 // pred_region
        %s201 = ssub.s32 %s21, 1
        %p202 = scmp.lt.s32.totalorder %s26, 1
        %s203 = scalar_select %p202, %s26, 1
        %s204 = smul.addr %s203, 4
        %s205 = scalar_lea.vmem %s1, %s204
        %p206 = pneg %p47
        %p207 = pneg %p44
        %p208 = pneg %p68
        %p209 = pneg %p65
        %p210 = pneg %p89
        %p211 = pneg %p86
        %p212 = pneg %p110
        %p213 = pneg %p107
        %p214 = pneg %p131
        %p215 = pneg %p128
        %p216 = pneg %p157
        %p217 = pneg %p154
        %s218 = sand.u32 %s144, 1
        %s219 = scalar_lea.sflag [#allocation5], %s218
        %s220 = sand.u32 %s144, 1
        %s221 = smul.addr %s220, 8
        %s222 = scalar_lea.vmem [#allocation4], %s221
        %p223 = scmp.lt.s32.totalorder %s26, 1
        %s224 = scalar_select %p223, %s26, 1
        %s225 = smul.addr %s224, 4
        %s226 = scalar_lea.vmem %s1, %s225
        %v228 = vld [vmem:[%s226] sm:$0xf]
        %v229 = vld [vmem:[%s2] sm:$0xff]
        %v230 = vld [vmem:[%s2 + $0x8] sm:$0xff]
        %v231 = vld [vmem:[%s2 + $0x10] sm:$0xff]
        %v232 = vld [vmem:[%s2 + $0x18] sm:$0xff]
        %v233 = vld [vmem:[%s3] sm:$0x3]
        %v235 = vlaneseq
        %v236 = vshrl.u32 %v235, 7
        %v237 = vsub.s32 0, %v236
        %v238 = vrot.slane %v233, %v237
        %v239 = vlaneseq
        %v240 = vshrl.u32 %v239, 7
        %v241 = vsub.s32 1, %v240
        %v242 = vrot.slane %v233, %v241
        %v249 = vunpack.c.l.b16 %v229
        %v250 = vunpack.c.h.b16 %v229
        %v251 = vunpack.c.l.b16 %v230
        %v252 = vunpack.c.h.b16 %v230
        %v253 = vunpack.c.l.b16 %v231
        %v254 = vunpack.c.h.b16 %v231
        %v255 = vunpack.c.l.b16 %v232
        %v256 = vunpack.c.h.b16 %v232
        %v257 = vpack.c.b16 %v251, %v249
        %v258 = vpack.c.b16 %v252, %v250
        %v259 = vpack.c.b16 %v255, %v253
        %v260 = vpack.c.b16 %v256, %v254
        %vm265 = vcmask 261120
        %v267 = vsel %vm265, %v228, 0
        %269 = vmatprep.subr.bf16.mxu0 %v258
        %270 = vmatpush1.bf16.msra.mxu0 %v257
        %271 = vmatprep.subr.bf16.mxu0 %v260
        %272 = vmatpush1.bf16.msra.mxu0 %v259
        %273 = vmatprep.subr.bf16.mxu0 0
        %274 = vmatpush1.bf16.msra.mxu0 0
        %275 = vmatprep.subr.bf16.mxu0 0
        %276 = vmatpush1.bf16.msra.mxu0 0
        %277 = vmatprep.subr.bf16.mxu0 0
        %278 = vmatpush1.bf16.msra.mxu0 0
        %279 = vmatprep.subr.bf16.mxu0 0
        %280 = vmatpush1.bf16.msra.mxu0 0
        %281 = vmatprep.subr.bf16.mxu0 0
        %282 = vmatpush1.bf16.msra.mxu0 0
        %283 = vmatprep.subr.bf16.mxu0 0
        %284 = vmatpush1.bf16.msra.mxu0 0
        %285 = vmatprep.subr.bf16.mxu0 0
        %286 = vmatpush1.bf16.msra.mxu0 0
        %287 = vmatprep.subr.bf16.mxu0 0
        %288 = vmatpush1.bf16.msra.mxu0 0
        %289 = vmatprep.subr.bf16.mxu0 0
        %290 = vmatpush1.bf16.msra.mxu0 0
        %291 = vmatprep.subr.bf16.mxu0 0
        %292 = vmatpush1.bf16.msra.mxu0 0
        %293 = vmatprep.subr.bf16.mxu0 0
        %294 = vmatpush1.bf16.msra.mxu0 0
        %295 = vmatprep.subr.bf16.mxu0 0
        %296 = vmatpush1.bf16.msra.mxu0 0
        %297 = vmatprep.subr.bf16.mxu0 0
        %298 = vmatpush1.bf16.msra.mxu0 0
        %299 = vmatprep.subr.bf16.mxu0 0
        %300 = vmatpush1.bf16.msra.mxu0 0
        %301 = vmatprep.mubr.bf16.mxu0 0
        %302 = vmatmul.mubr.bf16.gmra.mrb[0].mxu0 %v267
        %v303 = vpop.f32.mrb[0].mxu0
        %v304 = vadd.f32 %v238, %v303
        %v305 = vpop.f32.mrb[0].mxu0
        %v306 = vadd.f32 %v242, %v305
        %v307 = vpop.f32.mrb[0].mxu0
        %v308 = vpop.f32.mrb[0].mxu0
        %309 = vdwg.mxu0
        %v310 = vlaneseq
        %v311 = vshrl.u32 %v310, 7
        %s312 = sld [smem:[#allocation3 + %s26]]
        %v313 = vstv %s312
        %vm314 = vcmp.lt.s32.totalorder %v311, %v313
        %v315 = vsel %vm314, 0.0, -1e+09
        %v316 = vld [vmem:[%s4] sm:$0xf]
        %v317 = vld [vmem:[%s4 + $0x4] sm:$0xf]
        %v318 = vld [vmem:[%s4 + $0x8] sm:$0xf]
        %v319 = vld [vmem:[%s4 + $0xc] sm:$0xf]
        %v320 = vld [vmem:[%s4 + $0x10] sm:$0xf]
        %v321 = vld [vmem:[%s4 + $0x14] sm:$0xf]
        %v322 = vld [vmem:[%s4 + $0x18] sm:$0xf]
        %v323 = vld [vmem:[%s4 + $0x1c] sm:$0xf]
        %v324 = vpack.c.bf16 %v304, %v304
        %v325 = vpack.c.bf16 %v306, %v306
        %327 = vrot.lane.b32.xlu0 %v324, 64
        %v328 = vpop.permute.xlu0 %327
        %vm329 = vcmask 130048
        %v331 = vsel %vm329, %v324, 0
        %v334 = vsel %vm329, %v328, 0
        %336 = vmatprep.subr.bf16.mxu0 0
        %337 = vmatpush1.bf16.xpose.msra.mxu0 %v334
        %338 = vmatprep.subr.bf16.mxu0 0
        %339 = vmatpush1.bf16.xpose.msra.mxu0 0
        %340 = vmatprep.subr.bf16.mxu0 0
        %341 = vmatpush1.bf16.xpose.msra.mxu0 0
        %342 = vmatprep.subr.bf16.mxu0 0
        %343 = vmatpush1.bf16.xpose.msra.mxu0 0
        %344 = vmatprep.subr.bf16.mxu0 0
        %345 = vmatpush1.bf16.xpose.msra.mxu0 0
        %346 = vmatprep.subr.bf16.mxu0 0
        %347 = vmatpush1.bf16.xpose.msra.mxu0 0
        %348 = vmatprep.subr.bf16.mxu0 0
        %349 = vmatpush1.bf16.xpose.msra.mxu0 0
        %350 = vmatprep.subr.bf16.mxu0 0
        %351 = vmatpush1.bf16.xpose.msra.mxu0 0
        %352 = vmatprep.subr.bf16.mxu0 0
        %353 = vmatpush1.bf16.xpose.msra.mxu0 0
        %354 = vmatprep.subr.bf16.mxu0 0
        %355 = vmatpush1.bf16.xpose.msra.mxu0 0
        %356 = vmatprep.subr.bf16.mxu0 0
        %357 = vmatpush1.bf16.xpose.msra.mxu0 0
        %358 = vmatprep.subr.bf16.mxu0 0
        %359 = vmatpush1.bf16.xpose.msra.mxu0 0
        %360 = vmatprep.subr.bf16.mxu0 0
        %361 = vmatpush1.bf16.xpose.msra.mxu0 0
        %362 = vmatprep.subr.bf16.mxu0 0
        %363 = vmatpush1.bf16.xpose.msra.mxu0 0
        %364 = vmatprep.subr.bf16.mxu0 0
        %365 = vmatpush1.bf16.xpose.msra.mxu0 0
        %366 = vmatprep.subr.bf16.mxu0 0
        %367 = vmatpush1.bf16.xpose.msra.mxu0 0
        %368 = vmatprep.mubr.bf16.mxu0 0
        %369 = vmatmul.mubr.bf16.gmra.mrb[0].mxu0 %v331
        %v370 = vpop.f32.mrb[0].mxu0
        %v371 = vadd.f32 0.0, %v370
        %v372 = vpop.f32.mrb[0].mxu0
        %v373 = vpop.f32.mrb[0].mxu0
        %v374 = vpop.f32.mrb[0].mxu0
        %375 = vdwg.mxu0
        %v376 = vmul.f32 %v371, 0.25
        %v377 = vadd.f32 %v376, %v315
        %vm378 = vcmask 64512
        %v379 = vsel %vm378, %v377, -inf
        %380 = vmax.xlane.f32.xlu0 %v379
        %v381 = vpop.xlane.xlu0 %380
        %v382 = vsub.f32 %v377, %v381
        %v383 = vmul.f32 %v382, 1.442695
        %v384 = vpow.pop %v383
        %v385 = vsel %vm378, %v384, 0.0
        %386 = vadd.xlane.f32.xlu0 %v385
        %v387 = vpop.xlane.xlu0 %386
        %v388 = vrcp.pop %v387
        %v389 = vmul.f32 %v384, %v388
        %v390 = vpack.c.bf16 %v389, %v389
        %v392 = vsel %vm378, %v390, 0
        %vm394 = vcmask 1043456
        %v396 = vsel %vm394, %v325, 0
        %398 = vmatprep.subr.bf16.mxu0 0
        %399 = vmatpush1.bf16.msra.mxu0 %v396
        %400 = vmatprep.subr.bf16.mxu0 0
        %401 = vmatpush1.bf16.msra.mxu0 0
        %402 = vmatprep.subr.bf16.mxu0 0
        %403 = vmatpush1.bf16.msra.mxu0 0
        %404 = vmatprep.subr.bf16.mxu0 0
        %405 = vmatpush1.bf16.msra.mxu0 0
        %406 = vmatprep.subr.bf16.mxu0 0
        %407 = vmatpush1.bf16.msra.mxu0 0
        %408 = vmatprep.subr.bf16.mxu0 0
        %409 = vmatpush1.bf16.msra.mxu0 0
        %410 = vmatprep.subr.bf16.mxu0 0
        %411 = vmatpush1.bf16.msra.mxu0 0
        %412 = vmatprep.subr.bf16.mxu0 0
        %413 = vmatpush1.bf16.msra.mxu0 0
        %414 = vmatprep.subr.bf16.mxu0 0
        %415 = vmatpush1.bf16.msra.mxu0 0
        %416 = vmatprep.subr.bf16.mxu0 0
        %417 = vmatpush1.bf16.msra.mxu0 0
        %418 = vmatprep.subr.bf16.mxu0 0
        %419 = vmatpush1.bf16.msra.mxu0 0
        %420 = vmatprep.subr.bf16.mxu0 0
        %421 = vmatpush1.bf16.msra.mxu0 0
        %422 = vmatprep.subr.bf16.mxu0 0
        %423 = vmatpush1.bf16.msra.mxu0 0
        %424 = vmatprep.subr.bf16.mxu0 0
        %425 = vmatpush1.bf16.msra.mxu0 0
        %426 = vmatprep.subr.bf16.mxu0 0
        %427 = vmatpush1.bf16.msra.mxu0 0
        %428 = vmatprep.subr.bf16.mxu0 0
        %429 = vmatpush1.bf16.msra.mxu0 0
        %430 = vmatprep.mubr.bf16.mxu0 0
        %431 = vmatmul.mubr.bf16.gmra.mrb[0].mxu0 %v392
        %v432 = vpop.f32.mrb[0].mxu0
        %v433 = vadd.f32 0.0, %v432
        %v434 = vpop.f32.mrb[0].mxu0
        %v435 = vpop.f32.mrb[0].mxu0
        %v436 = vpop.f32.mrb[0].mxu0
        %437 = vdwg.mxu0
        %v438 = vpack.c.bf16 %v433, %v433
        %439 = vrot.lane.b32.xlu0 %v324, 112
        %v440 = vpop.permute.xlu0 %439
        %441 = vrot.lane.b32.xlu0 %v324, 48
        %v442 = vpop.permute.xlu0 %441
        %v444 = vsel %vm329, %v440, 0
        %v447 = vsel %vm329, %v442, 0
        %449 = vmatprep.subr.bf16.mxu0 0
        %450 = vmatpush1.bf16.xpose.msra.mxu0 %v447
        %451 = vmatprep.subr.bf16.mxu0 0
        %452 = vmatpush1.bf16.xpose.msra.mxu0 0
        %453 = vmatprep.subr.bf16.mxu0 0
        %454 = vmatpush1.bf16.xpose.msra.mxu0 0
        %455 = vmatprep.subr.bf16.mxu0 0
        %456 = vmatpush1.bf16.xpose.msra.mxu0 0
        %457 = vmatprep.subr.bf16.mxu0 0
        %458 = vmatpush1.bf16.xpose.msra.mxu0 0
        %459 = vmatprep.subr.bf16.mxu0 0
        %460 = vmatpush1.bf16.xpose.msra.mxu0 0
        %461 = vmatprep.subr.bf16.mxu0 0
        %462 = vmatpush1.bf16.xpose.msra.mxu0 0
        %463 = vmatprep.subr.bf16.mxu0 0
        %464 = vmatpush1.bf16.xpose.msra.mxu0 0
        %465 = vmatprep.subr.bf16.mxu0 0
        %466 = vmatpush1.bf16.xpose.msra.mxu0 0
        %467 = vmatprep.subr.bf16.mxu0 0
        %468 = vmatpush1.bf16.xpose.msra.mxu0 0
        %469 = vmatprep.subr.bf16.mxu0 0
        %470 = vmatpush1.bf16.xpose.msra.mxu0 0
        %471 = vmatprep.subr.bf16.mxu0 0
        %472 = vmatpush1.bf16.xpose.msra.mxu0 0
        %473 = vmatprep.subr.bf16.mxu0 0
        %474 = vmatpush1.bf16.xpose.msra.mxu0 0
        %475 = vmatprep.subr.bf16.mxu0 0
        %476 = vmatpush1.bf16.xpose.msra.mxu0 0
        %477 = vmatprep.subr.bf16.mxu0 0
        %478 = vmatpush1.bf16.xpose.msra.mxu0 0
        %479 = vmatprep.subr.bf16.mxu0 0
        %480 = vmatpush1.bf16.xpose.msra.mxu0 0
        %481 = vmatprep.mubr.bf16.mxu0 0
        %482 = vmatmul.mubr.bf16.gmra.mrb[0].mxu0 %v444
        %v483 = vpop.f32.mrb[0].mxu0
        %v484 = vadd.f32 0.0, %v483
        %v485 = vpop.f32.mrb[0].mxu0
        %v486 = vpop.f32.mrb[0].mxu0
        %v487 = vpop.f32.mrb[0].mxu0
        %488 = vdwg.mxu0
        %v489 = vmul.f32 %v484, 0.25
        %v490 = vadd.f32 %v489, %v315
        %v491 = vsel %vm378, %v490, -inf
        %492 = vmax.xlane.f32.xlu0 %v491
        %v493 = vpop.xlane.xlu0 %492
        %v494 = vsub.f32 %v490, %v493
        %v495 = vmul.f32 %v494, 1.442695
        %v496 = vpow.pop %v495
        %v497 = vsel %vm378, %v496, 0.0
        %498 = vadd.xlane.f32.xlu0 %v497
        %v499 = vpop.xlane.xlu0 %498
        %v500 = vrcp.pop %v499
        %v501 = vmul.f32 %v496, %v500
        %v502 = vpack.c.bf16 %v501, %v501
        %504 = vrot.lane.b32.xlu0 %v325, 112
        %v505 = vpop.permute.xlu0 %504
        %v507 = vsel %vm378, %v502, 0
        %v510 = vsel %vm394, %v505, 0
        %512 = vmatprep.subr.bf16.mxu0 0
        %513 = vmatpush1.bf16.msra.mxu0 %v510
        %514 = vmatprep.subr.bf16.mxu0 0
        %515 = vmatpush1.bf16.msra.mxu0 0
        %516 = vmatprep.subr.bf16.mxu0 0
        %517 = vmatpush1.bf16.msra.mxu0 0
        %518 = vmatprep.subr.bf16.mxu0 0
        %519 = vmatpush1.bf16.msra.mxu0 0
        %520 = vmatprep.subr.bf16.mxu0 0
        %521 = vmatpush1.bf16.msra.mxu0 0
        %522 = vmatprep.subr.bf16.mxu0 0
        %523 = vmatpush1.bf16.msra.mxu0 0
        %524 = vmatprep.subr.bf16.mxu0 0
        %525 = vmatpush1.bf16.msra.mxu0 0
        %526 = vmatprep.subr.bf16.mxu0 0
        %527 = vmatpush1.bf16.msra.mxu0 0
        %528 = vmatprep.subr.bf16.mxu0 0
        %529 = vmatpush1.bf16.msra.mxu0 0
        %530 = vmatprep.subr.bf16.mxu0 0
        %531 = vmatpush1.bf16.msra.mxu0 0
        %532 = vmatprep.subr.bf16.mxu0 0
        %533 = vmatpush1.bf16.msra.mxu0 0
        %534 = vmatprep.subr.bf16.mxu0 0
        %535 = vmatpush1.bf16.msra.mxu0 0
        %536 = vmatprep.subr.bf16.mxu0 0
        %537 = vmatpush1.bf16.msra.mxu0 0
        %538 = vmatprep.subr.bf16.mxu0 0
        %539 = vmatpush1.bf16.msra.mxu0 0
        %540 = vmatprep.subr.bf16.mxu0 0
        %541 = vmatpush1.bf16.msra.mxu0 0
        %542 = vmatprep.subr.bf16.mxu0 0
        %543 = vmatpush1.bf16.msra.mxu0 0
        %544 = vmatprep.mubr.bf16.mxu0 0
        %545 = vmatmul.mubr.bf16.gmra.mrb[0].mxu0 %v507
        %v546 = vpop.f32.mrb[0].mxu0
        %v547 = vadd.f32 0.0, %v546
        %v548 = vpop.f32.mrb[0].mxu0
        %v549 = vpop.f32.mrb[0].mxu0
        %v550 = vpop.f32.mrb[0].mxu0
        %551 = vdwg.mxu0
        %v552 = vpack.c.bf16 %v547, %v547
        %v555 = vunpack.c.l.b16 %v318
        %v556 = vunpack.c.l.b16 %v319
        %v557 = vpack.c.b16 %v556, %v555
        %v560 = vsel %vm329, %v552, 0
        %562 = vmatprep.subr.bf16.mxu0 0
        %563 = vmatpush1.bf16.msra.mxu0 %v557
        %564 = vmatprep.subr.bf16.mxu0 0
        %565 = vmatpush1.bf16.msra.mxu0 0
        %566 = vmatprep.subr.bf16.mxu0 0
        %567 = vmatpush1.bf16.msra.mxu0 0
        %568 = vmatprep.subr.bf16.mxu0 0
        %569 = vmatpush1.bf16.msra.mxu0 0
        %570 = vmatprep.subr.bf16.mxu0 0
        %571 = vmatpush1.bf16.msra.mxu0 0
        %572 = vmatprep.subr.bf16.mxu0 0
        %573 = vmatpush1.bf16.msra.mxu0 0
        %574 = vmatprep.subr.bf16.mxu0 0
        %575 = vmatpush1.bf16.msra.mxu0 0
        %576 = vmatprep.subr.bf16.mxu0 0
        %577 = vmatpush1.bf16.msra.mxu0 0
        %578 = vmatprep.subr.bf16.mxu0 0
        %579 = vmatpush1.bf16.msra.mxu0 0
        %580 = vmatprep.subr.bf16.mxu0 0
        %581 = vmatpush1.bf16.msra.mxu0 0
        %582 = vmatprep.subr.bf16.mxu0 0
        %583 = vmatpush1.bf16.msra.mxu0 0
        %584 = vmatprep.subr.bf16.mxu0 0
        %585 = vmatpush1.bf16.msra.mxu0 0
        %586 = vmatprep.subr.bf16.mxu0 0
        %587 = vmatpush1.bf16.msra.mxu0 0
        %588 = vmatprep.subr.bf16.mxu0 0
        %589 = vmatpush1.bf16.msra.mxu0 0
        %590 = vmatprep.subr.bf16.mxu0 0
        %591 = vmatpush1.bf16.msra.mxu0 0
        %592 = vmatprep.subr.bf16.mxu0 0
        %593 = vmatpush1.bf16.msra.mxu0 0
        %594 = vmatprep.mubr.bf16.mxu0 0
        %595 = vmatmul.mubr.bf16.gmra.mrb[0].mxu0 %v560
        %v596 = vpop.f32.mrb[0].mxu0
        %v597 = vadd.f32 0.0, %v596
        %v598 = vpop.f32.mrb[0].mxu0
        %v599 = vpop.f32.mrb[0].mxu0
        %v600 = vpop.f32.mrb[0].mxu0
        %601 = vdwg.mxu0
        %v604 = vunpack.c.l.b16 %v316
        %v605 = vunpack.c.l.b16 %v317
        %v606 = vpack.c.b16 %v605, %v604
        %v609 = vsel %vm329, %v438, 0
        %611 = vmatprep.subr.bf16.mxu0 0
        %612 = vmatpush1.bf16.msra.mxu0 %v606
        %613 = vmatprep.subr.bf16.mxu0 0
        %614 = vmatpush1.bf16.msra.mxu0 0
        %615 = vmatprep.subr.bf16.mxu0 0
        %616 = vmatpush1.bf16.msra.mxu0 0
        %617 = vmatprep.subr.bf16.mxu0 0
        %618 = vmatpush1.bf16.msra.mxu0 0
        %619 = vmatprep.subr.bf16.mxu0 0
        %620 = vmatpush1.bf16.msra.mxu0 0
        %621 = vmatprep.subr.bf16.mxu0 0
        %622 = vmatpush1.bf16.msra.mxu0 0
        %623 = vmatprep.subr.bf16.mxu0 0
        %624 = vmatpush1.bf16.msra.mxu0 0
        %625 = vmatprep.subr.bf16.mxu0 0
        %626 = vmatpush1.bf16.msra.mxu0 0
        %627 = vmatprep.subr.bf16.mxu0 0
        %628 = vmatpush1.bf16.msra.mxu0 0
        %629 = vmatprep.subr.bf16.mxu0 0
        %630 = vmatpush1.bf16.msra.mxu0 0
        %631 = vmatprep.subr.bf16.mxu0 0
        %632 = vmatpush1.bf16.msra.mxu0 0
        %633 = vmatprep.subr.bf16.mxu0 0
        %634 = vmatpush1.bf16.msra.mxu0 0
        %635 = vmatprep.subr.bf16.mxu0 0
        %636 = vmatpush1.bf16.msra.mxu0 0
        %637 = vmatprep.subr.bf16.mxu0 0
        %638 = vmatpush1.bf16.msra.mxu0 0
        %639 = vmatprep.subr.bf16.mxu0 0
        %640 = vmatpush1.bf16.msra.mxu0 0
        %641 = vmatprep.subr.bf16.mxu0 0
        %642 = vmatpush1.bf16.msra.mxu0 0
        %643 = vmatprep.mubr.bf16.mxu0 0
        %644 = vmatmul.mubr.bf16.gmra.mrb[0].mxu0 %v609
        %v645 = vpop.f32.mrb[0].mxu0
        %v646 = vadd.f32 %v597, %v645
        %v647 = vpop.f32.mrb[0].mxu0
        %v648 = vpop.f32.mrb[0].mxu0
        %v649 = vpop.f32.mrb[0].mxu0
        %650 = vdwg.mxu0
        %651 = vrot.lane.b32.xlu0 %v324, 96
        %v652 = vpop.permute.xlu0 %651
        %653 = vrot.lane.b32.xlu0 %v324, 32
        %v654 = vpop.permute.xlu0 %653
        %v656 = vsel %vm329, %v652, 0
        %v659 = vsel %vm329, %v654, 0
        %661 = vmatprep.subr.bf16.mxu0 0
        %662 = vmatpush1.bf16.xpose.msra.mxu0 %v659
        %663 = vmatprep.subr.bf16.mxu0 0
        %664 = vmatpush1.bf16.xpose.msra.mxu0 0
        %665 = vmatprep.subr.bf16.mxu0 0
        %666 = vmatpush1.bf16.xpose.msra.mxu0 0
        %667 = vmatprep.subr.bf16.mxu0 0
        %668 = vmatpush1.bf16.xpose.msra.mxu0 0
        %669 = vmatprep.subr.bf16.mxu0 0
        %670 = vmatpush1.bf16.xpose.msra.mxu0 0
        %671 = vmatprep.subr.bf16.mxu0 0
        %672 = vmatpush1.bf16.xpose.msra.mxu0 0
        %673 = vmatprep.subr.bf16.mxu0 0
        %674 = vmatpush1.bf16.xpose.msra.mxu0 0
        %675 = vmatprep.subr.bf16.mxu0 0
        %676 = vmatpush1.bf16.xpose.msra.mxu0 0
        %677 = vmatprep.subr.bf16.mxu0 0
        %678 = vmatpush1.bf16.xpose.msra.mxu0 0
        %679 = vmatprep.subr.bf16.mxu0 0
        %680 = vmatpush1.bf16.xpose.msra.mxu0 0
        %681 = vmatprep.subr.bf16.mxu0 0
        %682 = vmatpush1.bf16.xpose.msra.mxu0 0
        %683 = vmatprep.subr.bf16.mxu0 0
        %684 = vmatpush1.bf16.xpose.msra.mxu0 0
        %685 = vmatprep.subr.bf16.mxu0 0
        %686 = vmatpush1.bf16.xpose.msra.mxu0 0
        %687 = vmatprep.subr.bf16.mxu0 0
        %688 = vmatpush1.bf16.xpose.msra.mxu0 0
        %689 = vmatprep.subr.bf16.mxu0 0
        %690 = vmatpush1.bf16.xpose.msra.mxu0 0
        %691 = vmatprep.subr.bf16.mxu0 0
        %692 = vmatpush1.bf16.xpose.msra.mxu0 0
        %693 = vmatprep.mubr.bf16.mxu0 0
        %694 = vmatmul.mubr.bf16.gmra.mrb[0].mxu0 %v656
        %v695 = vpop.f32.mrb[0].mxu0
        %v696 = vadd.f32 0.0, %v695
        %v697 = vpop.f32.mrb[0].mxu0
        %v698 = vpop.f32.mrb[0].mxu0
        %v699 = vpop.f32.mrb[0].mxu0
        %700 = vdwg.mxu0
        %v701 = vmul.f32 %v696, 0.25
        %v702 = vadd.f32 %v701, %v315
        %v703 = vsel %vm378, %v702, -inf
        %704 = vmax.xlane.f32.xlu0 %v703
        %v705 = vpop.xlane.xlu0 %704
        %v706 = vsub.f32 %v702, %v705
        %v707 = vmul.f32 %v706, 1.442695
        %v708 = vpow.pop %v707
        %v709 = vsel %vm378, %v708, 0.0
        %710 = vadd.xlane.f32.xlu0 %v709
        %v711 = vpop.xlane.xlu0 %710
        %v712 = vrcp.pop %v711
        %v713 = vmul.f32 %v708, %v712
        %v714 = vpack.c.bf16 %v713, %v713
        %715 = vrot.lane.b32.xlu0 %v325, 96
        %v716 = vpop.permute.xlu0 %715
        %v718 = vsel %vm378, %v714, 0
        %v721 = vsel %vm394, %v716, 0
        %723 = vmatprep.subr.bf16.mxu0 0
        %724 = vmatpush1.bf16.msra.mxu0 %v721
        %725 = vmatprep.subr.bf16.mxu0 0
        %726 = vmatpush1.bf16.msra.mxu0 0
        %727 = vmatprep.subr.bf16.mxu0 0
        %728 = vmatpush1.bf16.msra.mxu0 0
        %729 = vmatprep.subr.bf16.mxu0 0
        %730 = vmatpush1.bf16.msra.mxu0 0
        %731 = vmatprep.subr.bf16.mxu0 0
        %732 = vmatpush1.bf16.msra.mxu0 0
        %733 = vmatprep.subr.bf16.mxu0 0
        %734 = vmatpush1.bf16.msra.mxu0 0
        %735 = vmatprep.subr.bf16.mxu0 0
        %736 = vmatpush1.bf16.msra.mxu0 0
        %737 = vmatprep.subr.bf16.mxu0 0
        %738 = vmatpush1.bf16.msra.mxu0 0
        %739 = vmatprep.subr.bf16.mxu0 0
        %740 = vmatpush1.bf16.msra.mxu0 0
        %741 = vmatprep.subr.bf16.mxu0 0
        %742 = vmatpush1.bf16.msra.mxu0 0
        %743 = vmatprep.subr.bf16.mxu0 0
        %744 = vmatpush1.bf16.msra.mxu0 0
        %745 = vmatprep.subr.bf16.mxu0 0
        %746 = vmatpush1.bf16.msra.mxu0 0
        %747 = vmatprep.subr.bf16.mxu0 0
        %748 = vmatpush1.bf16.msra.mxu0 0
        %749 = vmatprep.subr.bf16.mxu0 0
        %750 = vmatpush1.bf16.msra.mxu0 0
        %751 = vmatprep.subr.bf16.mxu0 0
        %752 = vmatpush1.bf16.msra.mxu0 0
        %753 = vmatprep.subr.bf16.mxu0 0
        %754 = vmatpush1.bf16.msra.mxu0 0
        %755 = vmatprep.mubr.bf16.mxu0 0
        %756 = vmatmul.mubr.bf16.gmra.mrb[0].mxu0 %v718
        %v757 = vpop.f32.mrb[0].mxu0
        %v758 = vadd.f32 0.0, %v757
        %v759 = vpop.f32.mrb[0].mxu0
        %v760 = vpop.f32.mrb[0].mxu0
        %v761 = vpop.f32.mrb[0].mxu0
        %762 = vdwg.mxu0
        %v763 = vpack.c.bf16 %v758, %v758
        %v766 = vunpack.c.l.b16 %v320
        %v767 = vunpack.c.l.b16 %v321
        %v768 = vpack.c.b16 %v767, %v766
        %v771 = vsel %vm329, %v763, 0
        %773 = vmatprep.subr.bf16.mxu0 0
        %774 = vmatpush1.bf16.msra.mxu0 %v768
        %775 = vmatprep.subr.bf16.mxu0 0
        %776 = vmatpush1.bf16.msra.mxu0 0
        %777 = vmatprep.subr.bf16.mxu0 0
        %778 = vmatpush1.bf16.msra.mxu0 0
        %779 = vmatprep.subr.bf16.mxu0 0
        %780 = vmatpush1.bf16.msra.mxu0 0
        %781 = vmatprep.subr.bf16.mxu0 0
        %782 = vmatpush1.bf16.msra.mxu0 0
        %783 = vmatprep.subr.bf16.mxu0 0
        %784 = vmatpush1.bf16.msra.mxu0 0
        %785 = vmatprep.subr.bf16.mxu0 0
        %786 = vmatpush1.bf16.msra.mxu0 0
        %787 = vmatprep.subr.bf16.mxu0 0
        %788 = vmatpush1.bf16.msra.mxu0 0
        %789 = vmatprep.subr.bf16.mxu0 0
        %790 = vmatpush1.bf16.msra.mxu0 0
        %791 = vmatprep.subr.bf16.mxu0 0
        %792 = vmatpush1.bf16.msra.mxu0 0
        %793 = vmatprep.subr.bf16.mxu0 0
        %794 = vmatpush1.bf16.msra.mxu0 0
        %795 = vmatprep.subr.bf16.mxu0 0
        %796 = vmatpush1.bf16.msra.mxu0 0
        %797 = vmatprep.subr.bf16.mxu0 0
        %798 = vmatpush1.bf16.msra.mxu0 0
        %799 = vmatprep.subr.bf16.mxu0 0
        %800 = vmatpush1.bf16.msra.mxu0 0
        %801 = vmatprep.subr.bf16.mxu0 0
        %802 = vmatpush1.bf16.msra.mxu0 0
        %803 = vmatprep.subr.bf16.mxu0 0
        %804 = vmatpush1.bf16.msra.mxu0 0
        %805 = vmatprep.mubr.bf16.mxu0 0
        %806 = vmatmul.mubr.bf16.gmra.mrb[0].mxu0 %v771
        %v807 = vpop.f32.mrb[0].mxu0
        %v808 = vadd.f32 0.0, %v807
        %v809 = vpop.f32.mrb[0].mxu0
        %v810 = vpop.f32.mrb[0].mxu0
        %v811 = vpop.f32.mrb[0].mxu0
        %812 = vdwg.mxu0
        %v813 = vadd.f32 %v646, %v808
        %814 = vrot.lane.b32.xlu0 %v324, 80
        %v815 = vpop.permute.xlu0 %814
        %816 = vrot.lane.b32.xlu0 %v324, 16
        %v817 = vpop.permute.xlu0 %816
        %v819 = vsel %vm329, %v815, 0
        %v822 = vsel %vm329, %v817, 0
        %824 = vmatprep.subr.bf16.mxu0 0
        %825 = vmatpush1.bf16.xpose.msra.mxu0 %v822
        %826 = vmatprep.subr.bf16.mxu0 0
        %827 = vmatpush1.bf16.xpose.msra.mxu0 0
        %828 = vmatprep.subr.bf16.mxu0 0
        %829 = vmatpush1.bf16.xpose.msra.mxu0 0
        %830 = vmatprep.subr.bf16.mxu0 0
        %831 = vmatpush1.bf16.xpose.msra.mxu0 0
        %832 = vmatprep.subr.bf16.mxu0 0
        %833 = vmatpush1.bf16.xpose.msra.mxu0 0
        %834 = vmatprep.subr.bf16.mxu0 0
        %835 = vmatpush1.bf16.xpose.msra.mxu0 0
        %836 = vmatprep.subr.bf16.mxu0 0
        %837 = vmatpush1.bf16.xpose.msra.mxu0 0
        %838 = vmatprep.subr.bf16.mxu0 0
        %839 = vmatpush1.bf16.xpose.msra.mxu0 0
        %840 = vmatprep.subr.bf16.mxu0 0
        %841 = vmatpush1.bf16.xpose.msra.mxu0 0
        %842 = vmatprep.subr.bf16.mxu0 0
        %843 = vmatpush1.bf16.xpose.msra.mxu0 0
        %844 = vmatprep.subr.bf16.mxu0 0
        %845 = vmatpush1.bf16.xpose.msra.mxu0 0
        %846 = vmatprep.subr.bf16.mxu0 0
        %847 = vmatpush1.bf16.xpose.msra.mxu0 0
        %848 = vmatprep.subr.bf16.mxu0 0
        %849 = vmatpush1.bf16.xpose.msra.mxu0 0
        %850 = vmatprep.subr.bf16.mxu0 0
        %851 = vmatpush1.bf16.xpose.msra.mxu0 0
        %852 = vmatprep.subr.bf16.mxu0 0
        %853 = vmatpush1.bf16.xpose.msra.mxu0 0
        %854 = vmatprep.subr.bf16.mxu0 0
        %855 = vmatpush1.bf16.xpose.msra.mxu0 0
        %856 = vmatprep.mubr.bf16.mxu0 0
        %857 = vmatmul.mubr.bf16.gmra.mrb[0].mxu0 %v819
        %v858 = vpop.f32.mrb[0].mxu0
        %v859 = vadd.f32 0.0, %v858
        %v860 = vpop.f32.mrb[0].mxu0
        %v861 = vpop.f32.mrb[0].mxu0
        %v862 = vpop.f32.mrb[0].mxu0
        %863 = vdwg.mxu0
        %v864 = vmul.f32 %v859, 0.25
        %v865 = vadd.f32 %v864, %v315
        %v866 = vsel %vm378, %v865, -inf
        %867 = vmax.xlane.f32.xlu0 %v866
        %v868 = vpop.xlane.xlu0 %867
        %v869 = vsub.f32 %v865, %v868
        %v870 = vmul.f32 %v869, 1.442695
        %v871 = vpow.pop %v870
        %v872 = vsel %vm378, %v871, 0.0
        %873 = vadd.xlane.f32.xlu0 %v872
        %v874 = vpop.xlane.xlu0 %873
        %v875 = vrcp.pop %v874
        %v876 = vmul.f32 %v871, %v875
        %v877 = vpack.c.bf16 %v876, %v876
        %878 = vrot.lane.b32.xlu0 %v325, 80
        %v879 = vpop.permute.xlu0 %878
        %v881 = vsel %vm378, %v877, 0
        %v884 = vsel %vm394, %v879, 0
        %886 = vmatprep.subr.bf16.mxu0 0
        %887 = vmatpush1.bf16.msra.mxu0 %v884
        %888 = vmatprep.subr.bf16.mxu0 0
        %889 = vmatpush1.bf16.msra.mxu0 0
        %890 = vmatprep.subr.bf16.mxu0 0
        %891 = vmatpush1.bf16.msra.mxu0 0
        %892 = vmatprep.subr.bf16.mxu0 0
        %893 = vmatpush1.bf16.msra.mxu0 0
        %894 = vmatprep.subr.bf16.mxu0 0
        %895 = vmatpush1.bf16.msra.mxu0 0
        %896 = vmatprep.subr.bf16.mxu0 0
        %897 = vmatpush1.bf16.msra.mxu0 0
        %898 = vmatprep.subr.bf16.mxu0 0
        %899 = vmatpush1.bf16.msra.mxu0 0
        %900 = vmatprep.subr.bf16.mxu0 0
        %901 = vmatpush1.bf16.msra.mxu0 0
        %902 = vmatprep.subr.bf16.mxu0 0
        %903 = vmatpush1.bf16.msra.mxu0 0
        %904 = vmatprep.subr.bf16.mxu0 0
        %905 = vmatpush1.bf16.msra.mxu0 0
        %906 = vmatprep.subr.bf16.mxu0 0
        %907 = vmatpush1.bf16.msra.mxu0 0
        %908 = vmatprep.subr.bf16.mxu0 0
        %909 = vmatpush1.bf16.msra.mxu0 0
        %910 = vmatprep.subr.bf16.mxu0 0
        %911 = vmatpush1.bf16.msra.mxu0 0
        %912 = vmatprep.subr.bf16.mxu0 0
        %913 = vmatpush1.bf16.msra.mxu0 0
        %914 = vmatprep.subr.bf16.mxu0 0
        %915 = vmatpush1.bf16.msra.mxu0 0
        %916 = vmatprep.subr.bf16.mxu0 0
        %917 = vmatpush1.bf16.msra.mxu0 0
        %918 = vmatprep.mubr.bf16.mxu0 0
        %919 = vmatmul.mubr.bf16.gmra.mrb[0].mxu0 %v881
        %v920 = vpop.f32.mrb[0].mxu0
        %v921 = vadd.f32 0.0, %v920
        %v922 = vpop.f32.mrb[0].mxu0
        %v923 = vpop.f32.mrb[0].mxu0
        %v924 = vpop.f32.mrb[0].mxu0
        %925 = vdwg.mxu0
        %v926 = vpack.c.bf16 %v921, %v921
        %v929 = vunpack.c.l.b16 %v322
        %v930 = vunpack.c.l.b16 %v323
        %v931 = vpack.c.b16 %v930, %v929
        %v934 = vsel %vm329, %v926, 0
        %936 = vmatprep.subr.bf16.mxu0 0
        %937 = vmatpush1.bf16.msra.mxu0 %v931
        %938 = vmatprep.subr.bf16.mxu0 0
        %939 = vmatpush1.bf16.msra.mxu0 0
        %940 = vmatprep.subr.bf16.mxu0 0
        %941 = vmatpush1.bf16.msra.mxu0 0
        %942 = vmatprep.subr.bf16.mxu0 0
        %943 = vmatpush1.bf16.msra.mxu0 0
        %944 = vmatprep.subr.bf16.mxu0 0
        %945 = vmatpush1.bf16.msra.mxu0 0
        %946 = vmatprep.subr.bf16.mxu0 0
        %947 = vmatpush1.bf16.msra.mxu0 0
        %948 = vmatprep.subr.bf16.mxu0 0
        %949 = vmatpush1.bf16.msra.mxu0 0
        %950 = vmatprep.subr.bf16.mxu0 0
        %951 = vmatpush1.bf16.msra.mxu0 0
        %952 = vmatprep.subr.bf16.mxu0 0
        %953 = vmatpush1.bf16.msra.mxu0 0
        %954 = vmatprep.subr.bf16.mxu0 0
        %955 = vmatpush1.bf16.msra.mxu0 0
        %956 = vmatprep.subr.bf16.mxu0 0
        %957 = vmatpush1.bf16.msra.mxu0 0
        %958 = vmatprep.subr.bf16.mxu0 0
        %959 = vmatpush1.bf16.msra.mxu0 0
        %960 = vmatprep.subr.bf16.mxu0 0
        %961 = vmatpush1.bf16.msra.mxu0 0
        %962 = vmatprep.subr.bf16.mxu0 0
        %963 = vmatpush1.bf16.msra.mxu0 0
        %964 = vmatprep.subr.bf16.mxu0 0
        %965 = vmatpush1.bf16.msra.mxu0 0
        %966 = vmatprep.subr.bf16.mxu0 0
        %967 = vmatpush1.bf16.msra.mxu0 0
        %968 = vmatprep.mubr.bf16.mxu0 0
        %969 = vmatmul.mubr.bf16.gmra.mrb[0].mxu0 %v934
        %v970 = vpop.f32.mrb[0].mxu0
        %v971 = vadd.f32 0.0, %v970
        %v972 = vpop.f32.mrb[0].mxu0
        %v973 = vpop.f32.mrb[0].mxu0
        %v974 = vpop.f32.mrb[0].mxu0
        %975 = vdwg.mxu0
        %v976 = vadd.f32 %v813, %v971
        %v977 = vld [vmem:[%s5] sm:$0x1]
        %v979 = vlaneseq
        %v980 = vshrl.u32 %v979, 7
        %v981 = vsub.s32 0, %v980
        %v982 = vrot.slane %v977, %v981
        %v984 = vadd.f32 %v976, %v982
        %985 = vst.msk [vmem:[%s222] sm:$0xff] %vm265, %v984
        %s986 = sand.u32 %s144, 1
        %s987 = scalar_lea.sflag [#allocation5], %s986
        %s988 = sand.u32 %s144, 1
        %s989 = smul.addr %s988, 8
        %s990 = scalar_lea.vmem [#allocation4], %s989
        // Predicated region
        $region41: #{tpu_custom_call.1} parent=39 // pred_check
          %p991 = pneg %p154
        $region42: #{tpu_custom_call.1} parent=39 // pred_check_branch
          %993 = sbr.rel (%p991) target = $region44
        $region43: #{tpu_custom_call.1} parent=39 // pred_region
          %s995 = ssub.s32 128, 128
          %996 = vsyncadd %s987, %s995
          %s997 = smul.addr %s26, 128
          %s998 = scalar_lea.hbm %s6, %s997
          %s1000 = sshll.u32 %s990, 4
          %s1001 = int_to_ptr.vmem [resolvable:$true] %s1000
          %1003 = dma.vmem_to_hbm [thread:$0]  %s1001, 128, %s998, %s987
        $region44: #{tpu_custom_call.1} parent=39 // pred_fallthru
          _
      $region40: #{tpu_custom_call.1} parent=5 // pred_fallthru
        _
      %p1004 = scmp.le.s32.totalorder 2, %s21
      // Predicated region
      $region45: #{tpu_custom_call.1} parent=5 // pred_check
        %p1005 = pneg %p1004
      $region46: #{tpu_custom_call.1} parent=5 // pred_check_branch
        %1007 = sbr.rel (%p1005) target = $region48
      $region47: #{tpu_custom_call.1} parent=5 // pred_region
        %s1008 = ssub.s32 %s21, 2
        // Predicated region
        $region49: #{tpu_custom_call.1} parent=47 // pred_check
          %p1009 = pneg %p160
        $region50: #{tpu_custom_call.1} parent=47 // pred_check_branch
          %1011 = sbr.rel (%p1009) target = $region52
        $region51: #{tpu_custom_call.1} parent=47 // pred_region
          %s1012 = sand.u32 %s145, 1
          %s1013 = scalar_lea.sflag [#allocation5], %s1012
          %s1014 = sand.u32 %s145, 1
          %s1015 = smul.addr %s1014, 8
          %s1016 = scalar_lea.vmem [#allocation4], %s1015
          %1017 = dma.done %s1013, 128
        $region52: #{tpu_custom_call.1} parent=47 // pred_fallthru
          _
      $region48: #{tpu_custom_call.1} parent=5 // pred_fallthru
        _
    $region6: #{tpu_custom_call.1} parent=1 // loop_footer
      %s25 = sadd.s32 1, %s21
    $region7: #{tpu_custom_call.1} parent=1 // loop_footer_branch
      %20 = sbr.rel target = $region3
    $region8: #{tpu_custom_call.1} parent=1 // loop_exit
      _
    %1018 = vsyncpa [#allocation5], 1
    %s1019 = scalar_lea.sflag [#allocation5], 1
    %1020 = vsyncpa %s1019, 1

</llo_original>
